<compile_context>
chip_gen: v7x
topology: tpu7x:2x2x1
jax: 0.10.0
libtpu: 0.0.40
codegen_flags: <defaults>
</compile_context>

<pallas_src>
import jax
import jax.numpy as jnp
from jax.experimental import pallas as pl
from jax.experimental.pallas import tpu as pltpu


def _round_up(x, m):
    return (x + m - 1) // m * m


def mlp_block_kernel(x_ref, w1_ref, b1_ref, w2_ref, b2_ref, w3_ref, b3_ref, o_ref):
    # Cast the x tile to the MXU operand dtype (bf16) in-kernel: the HBM read of x stays a
    # single pass (no wrapper-side astype copy) and the cast is free VPU filler on this
    # DMA-bound kernel. Matmuls accumulate in f32; bias/ReLU/softmax epilogue stays f32.
    x = x_ref[...].astype(w1_ref.dtype)

    h1 = jnp.dot(x, w1_ref[...], preferred_element_type=jnp.float32)
    h1 = jnp.maximum(h1 + b1_ref[...], 0.0)

    h2 = jnp.dot(h1.astype(w2_ref.dtype), w2_ref[...], preferred_element_type=jnp.float32)
    h2 = jnp.maximum(h2 + b2_ref[...], 0.0)

    logits = jnp.dot(h2.astype(w3_ref.dtype), w3_ref[...], preferred_element_type=jnp.float32)
    logits = logits + b3_ref[...]          # b3 is f32; padded columns carry -1e30

    # Numerically-stable softmax over the lane-dense padded last dim. Padded columns have
    # bias -1e30 -> exp == 0 after subtracting the true row max, so the denominator is the
    # same as for the unpadded problem.
    m = jnp.max(logits, axis=-1, keepdims=True)
    e = jnp.exp(logits - m)
    denom = jnp.sum(e, axis=-1, keepdims=True)
    o_ref[...] = (e * pl.reciprocal(denom, approx=True)).astype(o_ref.dtype)


def mlp_block(x, params, *, tm=512, matmul_dtype=jnp.bfloat16, out_dtype=jnp.bfloat16):
    """x: (N, feature_dim) float32 (or bf16). params: dict of w1,b1,w2,b2,w3,b3 (f32)."""
    n, f = x.shape
    d1 = params["w1"].shape[1]   # 256
    d2 = params["w2"].shape[1]   # 128
    od = params["w3"].shape[1]   # output_dim

    # --- Lane-dense output: pad the final layer to a multiple of 128 columns. ---
    od_pad = max(128, _round_up(od, 128))
    w3 = params["w3"]
    b3 = params["b3"]
    if od_pad != od:
        w3 = jnp.pad(w3, ((0, 0), (0, od_pad - od)))
        # Huge negative bias in the padded columns -> exp(logit - max) == 0 exactly (f32).
        b3 = jnp.pad(b3, ((0, 0), (0, od_pad - od)), constant_values=-1e30)

    # --- Row tile selection. ---
    #  * clamp for tiny batches (multiple of 16: bf16 packs 16 sublanes/vreg)
    #  * cap so the grid keeps >= 2 steps when the batch allows it (v7x: 2 TensorCores
    #    share the "parallel" axis).
    tm = max(16, min(tm, _round_up(n, 16)))
    if n > 256:
        tm = min(tm, max(256, _round_up(pl.cdiv(n, 2), 256)))

    # Ragged last block instead of padding x (jnp.pad would be another full HBM pass):
    # OOB rows of the last block read garbage and their outputs are dropped on writeback.
    grid = (pl.cdiv(n, tm),)

    # Weights are tiny, so the wrapper-side bf16 cast is negligible; x is passed through
    # untouched (no cast, no pad) to keep its HBM traffic to a single read.
    w1 = params["w1"].astype(matmul_dtype)
    w2 = params["w2"].astype(matmul_dtype)
    w3 = w3.astype(matmul_dtype)
    b1 = params["b1"].astype(jnp.float32)
    b2 = params["b2"].astype(jnp.float32)
    b3 = b3.astype(jnp.float32)

    full = lambda i: (0, 0)   # constant block index -> fetched once, resident, no re-DMA

    out_itemsize = jnp.dtype(out_dtype).itemsize
    flops = 2 * n * (f * d1 + d1 * d2 + d2 * od_pad)
    bytes_accessed = (
        x.size * x.dtype.itemsize
        + w1.size * w1.dtype.itemsize
        + w2.size * w2.dtype.itemsize
        + w3.size * w3.dtype.itemsize
        + (b1.size + b2.size + b3.size) * 4
        + n * od_pad * out_itemsize
    )
    cost = pl.CostEstimate(
        flops=flops,
        transcendentals=n * od_pad + n,   # exp + reciprocal
        bytes_accessed=bytes_accessed,
    )

    out = pl.pallas_call(
        mlp_block_kernel,
        out_shape=jax.ShapeDtypeStruct((n, od_pad), out_dtype),
        grid_spec=pltpu.PrefetchScalarGridSpec(
            num_scalar_prefetch=0,
            grid=grid,
            in_specs=[
                pl.BlockSpec((tm, f), lambda i: (i, 0)),     # x rows (f32, cast in-kernel)
                pl.BlockSpec((f, d1), full),                 # w1 (bf16)
                pl.BlockSpec((1, d1), full),                 # b1 (f32)
                pl.BlockSpec((d1, d2), full),                # w2 (bf16)
                pl.BlockSpec((1, d2), full),                 # b2 (f32)
                pl.BlockSpec((d2, od_pad), full),            # w3 (bf16, lane-padded)
                pl.BlockSpec((1, od_pad), full),             # b3 (f32, -1e30 lane fill)
            ],
            out_specs=pl.BlockSpec((tm, od_pad), lambda i: (i, 0)),
        ),
        compiler_params=pltpu.CompilerParams(
            dimension_semantics=("parallel",),
            vmem_limit_bytes=32 * 1024 * 1024,   # v5e scoped default is ~16 MiB; raise it
        ),
        cost_estimate=cost,
    )(x, w1, b1, w2, b2, w3, b3)

    return out[:, :od]


def init_params(key, feature_dim, output_dim):
    """Deterministic synthetic params (PyTorch Linear-style uniform fan-in init)."""
    ks = jax.random.split(key, 6)

    def linear(kw, kb, fan_in, fan_out):
        bound = 1.0 / jnp.sqrt(fan_in)
        w = jax.random.uniform(kw, (fan_in, fan_out), jnp.float32, -bound, bound)
        b = jax.random.uniform(kb, (1, fan_out), jnp.float32, -bound, bound)
        return w, b

    w1, b1 = linear(ks[0], ks[1], feature_dim, 256)
    w2, b2 = linear(ks[2], ks[3], 256, 128)
    w3, b3 = linear(ks[4], ks[5], 128, output_dim)
    return {"w1": w1, "b1": b1, "w2": w2, "b2": b2, "w3": w3, "b3": b3}


def mlp_block_ref(x, p):
    h1 = jnp.maximum(x @ p["w1"] + p["b1"], 0.0)
    h2 = jnp.maximum(h1 @ p["w2"] + p["b2"], 0.0)
    return jax.nn.softmax(h2 @ p["w3"] + p["b3"], axis=-1)


if __name__ == "__main__":
    key = jax.random.PRNGKey(0)
    k_x, k_p = jax.random.split(key)

    batch = 16
    feature_dim = 1024   # module default: Linear(1024, 256)
    output_dim = 8

    x = jax.random.normal(k_x, (batch, feature_dim), jnp.float32)
    params = init_params(k_p, feature_dim, output_dim)

    out = jax.block_until_ready(mlp_block(x, params))

    ref = mlp_block_ref(x, params)
    assert out.shape == (batch, output_dim)
    out_f32 = out.astype(jnp.float32)
    # bf16 matmul operands + bf16 output + approx reciprocal -> loosened tolerance vs f32 ref.
    assert jnp.allclose(out_f32, ref, atol=2e-2, rtol=0), "mismatch vs f32 reference"
    assert jnp.allclose(jnp.sum(out_f32, axis=-1), 1.0, atol=1e-2), "softmax rows must sum to ~1"

    print("KERNEL_OK")
</pallas_src>

<mosaic_0001>
module attributes {stable_mosaic.version = 11 : i64} {
  func.func @mlp_block_kernel(%arg0: i32, %arg1: memref<16x1024xf32, #tpu.memory_space<vmem>>, %arg2: memref<1024x256xbf16, #tpu.memory_space<vmem>>, %arg3: memref<1x256xf32, #tpu.memory_space<vmem>>, %arg4: memref<256x128xbf16, #tpu.memory_space<vmem>>, %arg5: memref<1x128xf32, #tpu.memory_space<vmem>>, %arg6: memref<128x128xbf16, #tpu.memory_space<vmem>>, %arg7: memref<1x128xf32, #tpu.memory_space<vmem>>, %arg8: memref<16x128xbf16, #tpu.memory_space<vmem>>) attributes {dimension_semantics = [#tpu.dimension_semantics<parallel>], iteration_bounds = array<i64: 1>, scalar_prefetch = 0 : i64, scratch_operands = 0 : i64, tpu.core_type = #tpu.core_type<tc>, window_params = [{transform_indices = @transform_0, window_bounds = array<i64: 16, 1024>}, {pipeline_mode = #tpu.pipeline_mode<synchronous>, transform_indices = @transform_1, window_bounds = array<i64: 1024, 256>}, {pipeline_mode = #tpu.pipeline_mode<synchronous>, transform_indices = @transform_2, window_bounds = array<i64: 1, 256>}, {pipeline_mode = #tpu.pipeline_mode<synchronous>, transform_indices = @transform_3, window_bounds = array<i64: 256, 128>}, {pipeline_mode = #tpu.pipeline_mode<synchronous>, transform_indices = @transform_4, window_bounds = array<i64: 1, 128>}, {pipeline_mode = #tpu.pipeline_mode<synchronous>, transform_indices = @transform_5, window_bounds = array<i64: 128, 128>}, {pipeline_mode = #tpu.pipeline_mode<synchronous>, transform_indices = @transform_6, window_bounds = array<i64: 1, 128>}, {transform_indices = @transform_7, window_bounds = array<i64: 16, 128>}]} {
    %c0 = arith.constant 0 : index
    %c0_0 = arith.constant 0 : index
    %0 = vector.load %arg1[%c0, %c0_0] : memref<16x1024xf32, #tpu.memory_space<vmem>>, vector<16x1024xf32>
    %1 = arith.truncf %0 : vector<16x1024xf32> to vector<16x1024xbf16>
    %c0_1 = arith.constant 0 : index
    %c0_2 = arith.constant 0 : index
    %2 = vector.load %arg2[%c0_1, %c0_2] : memref<1024x256xbf16, #tpu.memory_space<vmem>>, vector<1024x256xbf16>
    %cst = arith.constant dense<0.000000e+00> : vector<16x256xf32>
    %3 = tpu.matmul %1, %2, %cst {dimension_numbers = #tpu.dot_dimension_numbers<[1], [0], [0], [1], [0, 0, 1, 1], [], []>} : vector<16x1024xbf16>, vector<1024x256xbf16>, vector<16x256xf32> -> vector<16x256xf32>
    %c0_3 = arith.constant 0 : index
    %c0_4 = arith.constant 0 : index
    %4 = vector.load %arg3[%c0_3, %c0_4] : memref<1x256xf32, #tpu.memory_space<vmem>>, vector<1x256xf32>
    %5 = vector.broadcast %4 : vector<1x256xf32> to vector<16x256xf32>
    %6 = arith.addf %3, %5 : vector<16x256xf32>
    %cst_5 = arith.constant 0.000000e+00 : f32
    %7 = vector.broadcast %cst_5 : f32 to vector<16x256xf32>
    %8 = arith.maximumf %6, %7 : vector<16x256xf32>
    %9 = arith.truncf %8 : vector<16x256xf32> to vector<16x256xbf16>
    %c0_6 = arith.constant 0 : index
    %c0_7 = arith.constant 0 : index
    %10 = vector.load %arg4[%c0_6, %c0_7] : memref<256x128xbf16, #tpu.memory_space<vmem>>, vector<256x128xbf16>
    %cst_8 = arith.constant dense<0.000000e+00> : vector<16x128xf32>
    %11 = tpu.matmul %9, %10, %cst_8 {dimension_numbers = #tpu.dot_dimension_numbers<[1], [0], [0], [1], [0, 0, 1, 1], [], []>} : vector<16x256xbf16>, vector<256x128xbf16>, vector<16x128xf32> -> vector<16x128xf32>
    %c0_9 = arith.constant 0 : index
    %c0_10 = arith.constant 0 : index
    %12 = vector.load %arg5[%c0_9, %c0_10] : memref<1x128xf32, #tpu.memory_space<vmem>>, vector<1x128xf32>
    %13 = vector.broadcast %12 : vector<1x128xf32> to vector<16x128xf32>
    %14 = arith.addf %11, %13 : vector<16x128xf32>
    %cst_11 = arith.constant 0.000000e+00 : f32
    %15 = vector.broadcast %cst_11 : f32 to vector<16x128xf32>
    %16 = arith.maximumf %14, %15 : vector<16x128xf32>
    %17 = arith.truncf %16 : vector<16x128xf32> to vector<16x128xbf16>
    %c0_12 = arith.constant 0 : index
    %c0_13 = arith.constant 0 : index
    %18 = vector.load %arg6[%c0_12, %c0_13] : memref<128x128xbf16, #tpu.memory_space<vmem>>, vector<128x128xbf16>
    %cst_14 = arith.constant dense<0.000000e+00> : vector<16x128xf32>
    %19 = tpu.matmul %17, %18, %cst_14 {dimension_numbers = #tpu.dot_dimension_numbers<[1], [0], [0], [1], [0, 0, 1, 1], [], []>} : vector<16x128xbf16>, vector<128x128xbf16>, vector<16x128xf32> -> vector<16x128xf32>
    %c0_15 = arith.constant 0 : index
    %c0_16 = arith.constant 0 : index
    %20 = vector.load %arg7[%c0_15, %c0_16] : memref<1x128xf32, #tpu.memory_space<vmem>>, vector<1x128xf32>
    %21 = vector.broadcast %20 : vector<1x128xf32> to vector<16x128xf32>
    %22 = arith.addf %19, %21 : vector<16x128xf32>
    %cst_17 = arith.constant dense<0xFF800000> : vector<16xf32>
    %23 = vector.multi_reduction <maximumf>, %22, %cst_17 [1] : vector<16x128xf32> to vector<16xf32>
    %24 = vector.shape_cast %23 : vector<16xf32> to vector<16x1xf32>
    %25 = vector.broadcast %24 : vector<16x1xf32> to vector<16x128xf32>
    %26 = arith.subf %22, %25 : vector<16x128xf32>
    %27 = math.exp %26 : vector<16x128xf32>
    %cst_18 = arith.constant dense<0.000000e+00> : vector<16xf32>
    %28 = vector.multi_reduction <add>, %27, %cst_18 [1] : vector<16x128xf32> to vector<16xf32>
    %29 = vector.shape_cast %28 : vector<16xf32> to vector<16x1xf32>
    %30 = tpu.reciprocal %29 {approx = true} : vector<16x1xf32> -> vector<16x1xf32>
    %31 = vector.broadcast %30 : vector<16x1xf32> to vector<16x128xf32>
    %32 = arith.mulf %27, %31 : vector<16x128xf32>
    %33 = arith.truncf %32 : vector<16x128xf32> to vector<16x128xbf16>
    %c0_19 = arith.constant 0 : index
    %c0_20 = arith.constant 0 : index
    %34 = vector.load %arg8[%c0_19, %c0_20] : memref<16x128xbf16, #tpu.memory_space<vmem>>, vector<16x128xbf16>
    tpu.vector_store %arg8[%c0_19, %c0_20], %33 {strides = array<i32>} : memref<16x128xbf16, #tpu.memory_space<vmem>>, vector<16x128xbf16>,
    return
  }
  func.func @transform_0(%arg0: i32) -> (i32, i32) {
    %c0_i32 = arith.constant 0 : i32
    %c0_i32_0 = arith.constant 0 : i32
    return %arg0, %c0_i32 : i32, i32
  }
  func.func @transform_1(%arg0: i32) -> (i32, i32) {
    %c0_i32 = arith.constant 0 : i32
    %c0_i32_0 = arith.constant 0 : i32
    %c0_i32_1 = arith.constant 0 : i32
    return %c0_i32, %c0_i32_0 : i32, i32
  }
  func.func @transform_2(%arg0: i32) -> (i32, i32) {
    %c0_i32 = arith.constant 0 : i32
    %c0_i32_0 = arith.constant 0 : i32
    %c0_i32_1 = arith.constant 0 : i32
    return %c0_i32, %c0_i32_0 : i32, i32
  }
  func.func @transform_3(%arg0: i32) -> (i32, i32) {
    %c0_i32 = arith.constant 0 : i32
    %c0_i32_0 = arith.constant 0 : i32
    %c0_i32_1 = arith.constant 0 : i32
    return %c0_i32, %c0_i32_0 : i32, i32
  }
  func.func @transform_4(%arg0: i32) -> (i32, i32) {
    %c0_i32 = arith.constant 0 : i32
    %c0_i32_0 = arith.constant 0 : i32
    %c0_i32_1 = arith.constant 0 : i32
    return %c0_i32, %c0_i32_0 : i32, i32
  }
  func.func @transform_5(%arg0: i32) -> (i32, i32) {
    %c0_i32 = arith.constant 0 : i32
    %c0_i32_0 = arith.constant 0 : i32
    %c0_i32_1 = arith.constant 0 : i32
    return %c0_i32, %c0_i32_0 : i32, i32
  }
  func.func @transform_6(%arg0: i32) -> (i32, i32) {
    %c0_i32 = arith.constant 0 : i32
    %c0_i32_0 = arith.constant 0 : i32
    %c0_i32_1 = arith.constant 0 : i32
    return %c0_i32, %c0_i32_0 : i32, i32
  }
  func.func @transform_7(%arg0: i32) -> (i32, i32) {
    %c0_i32 = arith.constant 0 : i32
    %c0_i32_0 = arith.constant 0 : i32
    return %arg0, %c0_i32 : i32, i32
  }
}

</mosaic_0001>

<llo_original>
// kernel: tpu_custom_call.1
$region0: #{tpu_custom_call.1}
  #allocation0 [shape = 'u32[]', space=smem, size = 0x4, offset = 0x4, fixed_abs, tag = 'smem constant byte address 0x4 - core index']
  #allocation1 [shape = 'u32[144,128]{1,0:T(1,128)}', space=vmem, size = 0x12000, scoped, tag = 'internal scratch']
  %s0 = inlined_call_operand.hbm [shape: f32[16,1024], index: 0, kind: input, shape index: {}]
  %s1 = inlined_call_operand.hbm [shape: bf16[1024,256], index: 1, kind: input, shape index: {}]
  %s2 = inlined_call_operand.vmem [shape: f32[1,256], index: 2, kind: input, shape index: {}]
  %s3 = inlined_call_operand.hbm [shape: bf16[256,128], index: 3, kind: input, shape index: {}]
  %s4 = inlined_call_operand.vmem [shape: f32[1,128], index: 4, kind: input, shape index: {}]
  %s5 = inlined_call_operand.hbm [shape: bf16[128,128], index: 5, kind: input, shape index: {}]
  %s6 = inlined_call_operand.vmem [shape: f32[1,128], index: 6, kind: input, shape index: {}]
  %s7 = inlined_call_operand.hbm [shape: bf16[16,128], index: 7, kind: output, shape index: {}]
  %s8 = sld [smem:[#allocation0]]
  $region54: #{tpu_custom_call.1} parent=0
    _
  %s10 = ssub.s32 1, %s8
  %s11 = scalar_select 0, %s10, %s8
  $region1: #{tpu_custom_call.1} parent=0
    #allocation2 [shape = 'u8[65536]{0}', space=vmem, size = 0x10000, scoped, tag = 'input window, operand 0, single buffered']
    #allocation3 [shape = 's32[1]{0}', space=sflag, size = 0x4, scoped, tag = 'scoped memory for tpu_custom_call.1']
    #allocation4 [shape = 's32[1]{0}', space=sflag, size = 0x4, scoped, tag = 'scoped memory for tpu_custom_call.1']
    #allocation5 [shape = 'u8[524288]{0}', space=vmem, size = 0x80000, scoped, tag = 'input window, operand 1, single buffered']
    #allocation6 [shape = 's32[1]{0}', space=sflag, size = 0x4, scoped, tag = 'scoped memory for tpu_custom_call.1']
    #allocation7 [shape = 'u8[65536]{0}', space=vmem, size = 0x10000, scoped, tag = 'input window, operand 3, single buffered']
    #allocation8 [shape = 'u8[32768]{0}', space=vmem, size = 0x8000, scoped, tag = 'input window, operand 5, single buffered']
    #allocation9 [shape = 's32[1]{0}', space=sflag, size = 0x4, scoped, tag = 'scoped memory for tpu_custom_call.1']
    #allocation10 [shape = 'u8[4096]{0}', space=vmem, size = 0x1000, scoped, tag = 'output window, operand 0, single buffered']
    %12 = vsyncpa [#allocation3], 0
    %13 = vsyncpa [#allocation6], 0
    %14 = vsyncpa [#allocation9], 0
    %15 = vsyncpa [#allocation4], 0
    // Predicated region
    $region2: #{tpu_custom_call.1} parent=1 // pred_check
      _
    $region3: #{tpu_custom_call.1} parent=1 // pred_check_branch
      %17 = sbr.rel (0) target = $region5
    $region4: #{tpu_custom_call.1} parent=1 // pred_region
      %s19 = ssub.s32 2048, 2048
      %20 = vsyncadd [#allocation3], %s19
      %s21 = sshll.u32 [#allocation2], 4
      %s22 = int_to_ptr.vmem [resolvable:$true] %s21
      %27 = dma.hbm_to_vmem [thread:$0]  %s0, 2048, %s22, [#allocation3], 1024, 1024, 64
    $region5: #{tpu_custom_call.1} parent=1 // pred_fallthru
      _
    // Predicated region
    $region6: #{tpu_custom_call.1} parent=1 // pred_check
      _
    $region7: #{tpu_custom_call.1} parent=1 // pred_check_branch
      %29 = sbr.rel (0) target = $region9
    $region8: #{tpu_custom_call.1} parent=1 // pred_region
      %s31 = ssub.s32 16384, 16384
      %32 = vsyncadd [#allocation6], %s31
      %s33 = sshll.u32 [#allocation5], 4
      %s34 = int_to_ptr.vmem [resolvable:$true] %s33
      %39 = dma.hbm_to_vmem [thread:$0]  %s1, 16384, %s34, [#allocation6], 128, 128, 8
    $region9: #{tpu_custom_call.1} parent=1 // pred_fallthru
      _
    // Predicated region
    $region10: #{tpu_custom_call.1} parent=1 // pred_check
      _
    $region11: #{tpu_custom_call.1} parent=1 // pred_check_branch
      %41 = sbr.rel (0) target = $region13
    $region12: #{tpu_custom_call.1} parent=1 // pred_region
      _
    $region13: #{tpu_custom_call.1} parent=1 // pred_fallthru
      _
    // Predicated region
    $region14: #{tpu_custom_call.1} parent=1 // pred_check
      _
    $region15: #{tpu_custom_call.1} parent=1 // pred_check_branch
      %43 = sbr.rel (0) target = $region17
    $region16: #{tpu_custom_call.1} parent=1 // pred_region
      %s45 = ssub.s32 2048, 2048
      %46 = vsyncadd [#allocation6], %s45
      %s47 = sshll.u32 [#allocation7], 4
      %s48 = int_to_ptr.vmem [resolvable:$true] %s47
      %53 = dma.hbm_to_vmem [thread:$0]  %s3, 2048, %s48, [#allocation6], 64, 64, 4
    $region17: #{tpu_custom_call.1} parent=1 // pred_fallthru
      _
    // Predicated region
    $region18: #{tpu_custom_call.1} parent=1 // pred_check
      _
    $region19: #{tpu_custom_call.1} parent=1 // pred_check_branch
      %55 = sbr.rel (0) target = $region21
    $region20: #{tpu_custom_call.1} parent=1 // pred_region
      _
    $region21: #{tpu_custom_call.1} parent=1 // pred_fallthru
      _
    // Predicated region
    $region22: #{tpu_custom_call.1} parent=1 // pred_check
      _
    $region23: #{tpu_custom_call.1} parent=1 // pred_check_branch
      %57 = sbr.rel (0) target = $region25
    $region24: #{tpu_custom_call.1} parent=1 // pred_region
      %s59 = ssub.s32 1024, 1024
      %60 = vsyncadd [#allocation9], %s59
      %s61 = sshll.u32 [#allocation8], 4
      %s62 = int_to_ptr.vmem [resolvable:$true] %s61
      %67 = dma.hbm_to_vmem [thread:$0]  %s5, 1024, %s62, [#allocation9], 64, 64, 4
    $region25: #{tpu_custom_call.1} parent=1 // pred_fallthru
      _
    // Predicated region
    $region26: #{tpu_custom_call.1} parent=1 // pred_check
      _
    $region27: #{tpu_custom_call.1} parent=1 // pred_check_branch
      %69 = sbr.rel (0) target = $region29
    $region28: #{tpu_custom_call.1} parent=1 // pred_region
      _
    $region29: #{tpu_custom_call.1} parent=1 // pred_fallthru
      _
    // Predicated region
    $region30: #{tpu_custom_call.1} parent=1 // pred_check
      _
    $region31: #{tpu_custom_call.1} parent=1 // pred_check_branch
      %71 = sbr.rel (0) target = $region33
    $region32: #{tpu_custom_call.1} parent=1 // pred_region
      %72 = dma.done [#allocation3], 2048
    $region33: #{tpu_custom_call.1} parent=1 // pred_fallthru
      _
    // Predicated region
    $region34: #{tpu_custom_call.1} parent=1 // pred_check
      _
    $region35: #{tpu_custom_call.1} parent=1 // pred_check_branch
      %74 = sbr.rel (0) target = $region37
    $region36: #{tpu_custom_call.1} parent=1 // pred_region
      %75 = dma.done [#allocation6], 16384
    $region37: #{tpu_custom_call.1} parent=1 // pred_fallthru
      _
    // Predicated region
    $region38: #{tpu_custom_call.1} parent=1 // pred_check
      _
    $region39: #{tpu_custom_call.1} parent=1 // pred_check_branch
      %77 = sbr.rel (0) target = $region41
    $region40: #{tpu_custom_call.1} parent=1 // pred_region
      %78 = dma.done [#allocation6], 2048
    $region41: #{tpu_custom_call.1} parent=1 // pred_fallthru
      _
    // Predicated region
    $region42: #{tpu_custom_call.1} parent=1 // pred_check
      _
    $region43: #{tpu_custom_call.1} parent=1 // pred_check_branch
      %80 = sbr.rel (0) target = $region45
    $region44: #{tpu_custom_call.1} parent=1 // pred_region
      %81 = dma.done [#allocation9], 1024
    $region45: #{tpu_custom_call.1} parent=1 // pred_fallthru
      _
    %v83 = vld [vmem:[#allocation2] sm:$0xff]
    %v84 = vld [vmem:[#allocation2 + $0x8] sm:$0xff]
    %v85 = vld [vmem:[#allocation2 + $0x10] sm:$0xff]
    %v86 = vld [vmem:[#allocation2 + $0x18] sm:$0xff]
    %v87 = vld [vmem:[#allocation2 + $0x20] sm:$0xff]
    %v88 = vld [vmem:[#allocation2 + $0x28] sm:$0xff]
    %v89 = vld [vmem:[#allocation2 + $0x30] sm:$0xff]
    %v90 = vld [vmem:[#allocation2 + $0x38] sm:$0xff]
    %v91 = vld [vmem:[#allocation2 + $0x40] sm:$0xff]
    %v92 = vld [vmem:[#allocation2 + $0x48] sm:$0xff]
    %v93 = vld [vmem:[#allocation2 + $0x50] sm:$0xff]
    %v94 = vld [vmem:[#allocation2 + $0x58] sm:$0xff]
    %v95 = vld [vmem:[#allocation2 + $0x60] sm:$0xff]
    %v96 = vld [vmem:[#allocation2 + $0x68] sm:$0xff]
    %v97 = vld [vmem:[#allocation2 + $0x70] sm:$0xff]
    %v98 = vld [vmem:[#allocation2 + $0x78] sm:$0xff]
    %v99 = vpack.c.bf16 %v91, %v83
    %v100 = vpack.c.bf16 %v92, %v84
    %v101 = vpack.c.bf16 %v93, %v85
    %v102 = vpack.c.bf16 %v94, %v86
    %v103 = vpack.c.bf16 %v95, %v87
    %v104 = vpack.c.bf16 %v96, %v88
    %v105 = vpack.c.bf16 %v97, %v89
    %v106 = vpack.c.bf16 %v98, %v90
    %v107 = vld [vmem:[#allocation5] sm:$0xff]
    %v108 = vld [vmem:[#allocation5 + $0x8] sm:$0xff]
    %v109 = vld [vmem:[#allocation5 + $0x10] sm:$0xff]
    %v110 = vld [vmem:[#allocation5 + $0x18] sm:$0xff]
    %v111 = vld [vmem:[#allocation5 + $0x20] sm:$0xff]
    %v112 = vld [vmem:[#allocation5 + $0x28] sm:$0xff]
    %v113 = vld [vmem:[#allocation5 + $0x30] sm:$0xff]
    %v114 = vld [vmem:[#allocation5 + $0x38] sm:$0xff]
    %v115 = vld [vmem:[#allocation5 + $0x40] sm:$0xff]
    %v116 = vld [vmem:[#allocation5 + $0x48] sm:$0xff]
    %v117 = vld [vmem:[#allocation5 + $0x50] sm:$0xff]
    %v118 = vld [vmem:[#allocation5 + $0x58] sm:$0xff]
    %v119 = vld [vmem:[#allocation5 + $0x60] sm:$0xff]
    %v120 = vld [vmem:[#allocation5 + $0x68] sm:$0xff]
    %v121 = vld [vmem:[#allocation5 + $0x70] sm:$0xff]
    %v122 = vld [vmem:[#allocation5 + $0x78] sm:$0xff]
    %v123 = vld [vmem:[#allocation5 + $0x80] sm:$0xff]
    %v124 = vld [vmem:[#allocation5 + $0x88] sm:$0xff]
    %v125 = vld [vmem:[#allocation5 + $0x90] sm:$0xff]
    %v126 = vld [vmem:[#allocation5 + $0x98] sm:$0xff]
    %v127 = vld [vmem:[#allocation5 + $0xa0] sm:$0xff]
    %v128 = vld [vmem:[#allocation5 + $0xa8] sm:$0xff]
    %v129 = vld [vmem:[#allocation5 + $0xb0] sm:$0xff]
    %v130 = vld [vmem:[#allocation5 + $0xb8] sm:$0xff]
    %v131 = vld [vmem:[#allocation5 + $0xc0] sm:$0xff]
    %v132 = vld [vmem:[#allocation5 + $0xc8] sm:$0xff]
    %v133 = vld [vmem:[#allocation5 + $0xd0] sm:$0xff]
    %v134 = vld [vmem:[#allocation5 + $0xd8] sm:$0xff]
    %v135 = vld [vmem:[#allocation5 + $0xe0] sm:$0xff]
    %v136 = vld [vmem:[#allocation5 + $0xe8] sm:$0xff]
    %v137 = vld [vmem:[#allocation5 + $0xf0] sm:$0xff]
    %v138 = vld [vmem:[#allocation5 + $0xf8] sm:$0xff]
    %v139 = vld [vmem:[#allocation5 + $0x100] sm:$0xff]
    %v140 = vld [vmem:[#allocation5 + $0x108] sm:$0xff]
    %v141 = vld [vmem:[#allocation5 + $0x110] sm:$0xff]
    %v142 = vld [vmem:[#allocation5 + $0x118] sm:$0xff]
    %v143 = vld [vmem:[#allocation5 + $0x120] sm:$0xff]
    %v144 = vld [vmem:[#allocation5 + $0x128] sm:$0xff]
    %v145 = vld [vmem:[#allocation5 + $0x130] sm:$0xff]
    %v146 = vld [vmem:[#allocation5 + $0x138] sm:$0xff]
    %v147 = vld [vmem:[#allocation5 + $0x140] sm:$0xff]
    %v148 = vld [vmem:[#allocation5 + $0x148] sm:$0xff]
    %v149 = vld [vmem:[#allocation5 + $0x150] sm:$0xff]
    %v150 = vld [vmem:[#allocation5 + $0x158] sm:$0xff]
    %v151 = vld [vmem:[#allocation5 + $0x160] sm:$0xff]
    %v152 = vld [vmem:[#allocation5 + $0x168] sm:$0xff]
    %v153 = vld [vmem:[#allocation5 + $0x170] sm:$0xff]
    %v154 = vld [vmem:[#allocation5 + $0x178] sm:$0xff]
    %v155 = vld [vmem:[#allocation5 + $0x180] sm:$0xff]
    %v156 = vld [vmem:[#allocation5 + $0x188] sm:$0xff]
    %v157 = vld [vmem:[#allocation5 + $0x190] sm:$0xff]
    %v158 = vld [vmem:[#allocation5 + $0x198] sm:$0xff]
    %v159 = vld [vmem:[#allocation5 + $0x1a0] sm:$0xff]
    %v160 = vld [vmem:[#allocation5 + $0x1a8] sm:$0xff]
    %v161 = vld [vmem:[#allocation5 + $0x1b0] sm:$0xff]
    %v162 = vld [vmem:[#allocation5 + $0x1b8] sm:$0xff]
    %v163 = vld [vmem:[#allocation5 + $0x1c0] sm:$0xff]
    %v164 = vld [vmem:[#allocation5 + $0x1c8] sm:$0xff]
    %v165 = vld [vmem:[#allocation5 + $0x1d0] sm:$0xff]
    %v166 = vld [vmem:[#allocation5 + $0x1d8] sm:$0xff]
    %v167 = vld [vmem:[#allocation5 + $0x1e0] sm:$0xff]
    %v168 = vld [vmem:[#allocation5 + $0x1e8] sm:$0xff]
    %v169 = vld [vmem:[#allocation5 + $0x1f0] sm:$0xff]
    %v170 = vld [vmem:[#allocation5 + $0x1f8] sm:$0xff]
    %v171 = vld [vmem:[#allocation5 + $0x200] sm:$0xff]
    %v172 = vld [vmem:[#allocation5 + $0x208] sm:$0xff]
    %v173 = vld [vmem:[#allocation5 + $0x210] sm:$0xff]
    %v174 = vld [vmem:[#allocation5 + $0x218] sm:$0xff]
    %v175 = vld [vmem:[#allocation5 + $0x220] sm:$0xff]
    %v176 = vld [vmem:[#allocation5 + $0x228] sm:$0xff]
    %v177 = vld [vmem:[#allocation5 + $0x230] sm:$0xff]
    %v178 = vld [vmem:[#allocation5 + $0x238] sm:$0xff]
    %v179 = vld [vmem:[#allocation5 + $0x240] sm:$0xff]
    %v180 = vld [vmem:[#allocation5 + $0x248] sm:$0xff]
    %v181 = vld [vmem:[#allocation5 + $0x250] sm:$0xff]
    %v182 = vld [vmem:[#allocation5 + $0x258] sm:$0xff]
    %v183 = vld [vmem:[#allocation5 + $0x260] sm:$0xff]
    %v184 = vld [vmem:[#allocation5 + $0x268] sm:$0xff]
    %v185 = vld [vmem:[#allocation5 + $0x270] sm:$0xff]
    %v186 = vld [vmem:[#allocation5 + $0x278] sm:$0xff]
    %v187 = vld [vmem:[#allocation5 + $0x280] sm:$0xff]
    %v188 = vld [vmem:[#allocation5 + $0x288] sm:$0xff]
    %v189 = vld [vmem:[#allocation5 + $0x290] sm:$0xff]
    %v190 = vld [vmem:[#allocation5 + $0x298] sm:$0xff]
    %v191 = vld [vmem:[#allocation5 + $0x2a0] sm:$0xff]
    %v192 = vld [vmem:[#allocation5 + $0x2a8] sm:$0xff]
    %v193 = vld [vmem:[#allocation5 + $0x2b0] sm:$0xff]
    %v194 = vld [vmem:[#allocation5 + $0x2b8] sm:$0xff]
    %v195 = vld [vmem:[#allocation5 + $0x2c0] sm:$0xff]
    %v196 = vld [vmem:[#allocation5 + $0x2c8] sm:$0xff]
    %v197 = vld [vmem:[#allocation5 + $0x2d0] sm:$0xff]
    %v198 = vld [vmem:[#allocation5 + $0x2d8] sm:$0xff]
    %v199 = vld [vmem:[#allocation5 + $0x2e0] sm:$0xff]
    %v200 = vld [vmem:[#allocation5 + $0x2e8] sm:$0xff]
    %v201 = vld [vmem:[#allocation5 + $0x2f0] sm:$0xff]
    %v202 = vld [vmem:[#allocation5 + $0x2f8] sm:$0xff]
    %v203 = vld [vmem:[#allocation5 + $0x300] sm:$0xff]
    %v204 = vld [vmem:[#allocation5 + $0x308] sm:$0xff]
    %v205 = vld [vmem:[#allocation5 + $0x310] sm:$0xff]
    %v206 = vld [vmem:[#allocation5 + $0x318] sm:$0xff]
    %v207 = vld [vmem:[#allocation5 + $0x320] sm:$0xff]
    %v208 = vld [vmem:[#allocation5 + $0x328] sm:$0xff]
    %v209 = vld [vmem:[#allocation5 + $0x330] sm:$0xff]
    %v210 = vld [vmem:[#allocation5 + $0x338] sm:$0xff]
    %v211 = vld [vmem:[#allocation5 + $0x340] sm:$0xff]
    %v212 = vld [vmem:[#allocation5 + $0x348] sm:$0xff]
    %v213 = vld [vmem:[#allocation5 + $0x350] sm:$0xff]
    %v214 = vld [vmem:[#allocation5 + $0x358] sm:$0xff]
    %v215 = vld [vmem:[#allocation5 + $0x360] sm:$0xff]
    %v216 = vld [vmem:[#allocation5 + $0x368] sm:$0xff]
    %v217 = vld [vmem:[#allocation5 + $0x370] sm:$0xff]
    %v218 = vld [vmem:[#allocation5 + $0x378] sm:$0xff]
    %v219 = vld [vmem:[#allocation5 + $0x380] sm:$0xff]
    %v220 = vld [vmem:[#allocation5 + $0x388] sm:$0xff]
    %v221 = vld [vmem:[#allocation5 + $0x390] sm:$0xff]
    %v222 = vld [vmem:[#allocation5 + $0x398] sm:$0xff]
    %v223 = vld [vmem:[#allocation5 + $0x3a0] sm:$0xff]
    %v224 = vld [vmem:[#allocation5 + $0x3a8] sm:$0xff]
    %v225 = vld [vmem:[#allocation5 + $0x3b0] sm:$0xff]
    %v226 = vld [vmem:[#allocation5 + $0x3b8] sm:$0xff]
    %v227 = vld [vmem:[#allocation5 + $0x3c0] sm:$0xff]
    %v228 = vld [vmem:[#allocation5 + $0x3c8] sm:$0xff]
    %v229 = vld [vmem:[#allocation5 + $0x3d0] sm:$0xff]
    %v230 = vld [vmem:[#allocation5 + $0x3d8] sm:$0xff]
    %v231 = vld [vmem:[#allocation5 + $0x3e0] sm:$0xff]
    %v232 = vld [vmem:[#allocation5 + $0x3e8] sm:$0xff]
    %v233 = vld [vmem:[#allocation5 + $0x3f0] sm:$0xff]
    %v234 = vld [vmem:[#allocation5 + $0x3f8] sm:$0xff]
    %v235 = vld [vmem:[%s2] sm:$0x3]
    %v237 = vlaneseq
    %v238 = vshrl.u32 %v237, 7
    %v239 = vsub.s32 0, %v238
    %v240 = vrot.slane %v235, %v239
    %v241 = vlaneseq
    %v242 = vshrl.u32 %v241, 7
    %v243 = vsub.s32 1, %v242
    %v244 = vrot.slane %v235, %v243
    %v375 = vunpack.c.l.b16 %v107
    %v376 = vunpack.c.h.b16 %v107
    %v377 = vunpack.c.l.b16 %v108
    %v378 = vunpack.c.h.b16 %v108
    %v379 = vunpack.c.l.b16 %v109
    %v380 = vunpack.c.h.b16 %v109
    %v381 = vunpack.c.l.b16 %v110
    %v382 = vunpack.c.h.b16 %v110
    %v383 = vunpack.c.l.b16 %v111
    %v384 = vunpack.c.h.b16 %v111
    %v385 = vunpack.c.l.b16 %v112
    %v386 = vunpack.c.h.b16 %v112
    %v387 = vunpack.c.l.b16 %v113
    %v388 = vunpack.c.h.b16 %v113
    %v389 = vunpack.c.l.b16 %v114
    %v390 = vunpack.c.h.b16 %v114
    %v391 = vunpack.c.l.b16 %v115
    %v392 = vunpack.c.h.b16 %v115
    %v393 = vunpack.c.l.b16 %v116
    %v394 = vunpack.c.h.b16 %v116
    %v395 = vunpack.c.l.b16 %v117
    %v396 = vunpack.c.h.b16 %v117
    %v397 = vunpack.c.l.b16 %v118
    %v398 = vunpack.c.h.b16 %v118
    %v399 = vunpack.c.l.b16 %v119
    %v400 = vunpack.c.h.b16 %v119
    %v401 = vunpack.c.l.b16 %v120
    %v402 = vunpack.c.h.b16 %v120
    %v403 = vunpack.c.l.b16 %v121
    %v404 = vunpack.c.h.b16 %v121
    %v405 = vunpack.c.l.b16 %v122
    %v406 = vunpack.c.h.b16 %v122
    %v407 = vunpack.c.l.b16 %v123
    %v408 = vunpack.c.h.b16 %v123
    %v409 = vunpack.c.l.b16 %v124
    %v410 = vunpack.c.h.b16 %v124
    %v411 = vunpack.c.l.b16 %v125
    %v412 = vunpack.c.h.b16 %v125
    %v413 = vunpack.c.l.b16 %v126
    %v414 = vunpack.c.h.b16 %v126
    %v415 = vunpack.c.l.b16 %v127
    %v416 = vunpack.c.h.b16 %v127
    %v417 = vunpack.c.l.b16 %v128
    %v418 = vunpack.c.h.b16 %v128
    %v419 = vunpack.c.l.b16 %v129
    %v420 = vunpack.c.h.b16 %v129
    %v421 = vunpack.c.l.b16 %v130
    %v422 = vunpack.c.h.b16 %v130
    %v423 = vunpack.c.l.b16 %v131
    %v424 = vunpack.c.h.b16 %v131
    %v425 = vunpack.c.l.b16 %v132
    %v426 = vunpack.c.h.b16 %v132
    %v427 = vunpack.c.l.b16 %v133
    %v428 = vunpack.c.h.b16 %v133
    %v429 = vunpack.c.l.b16 %v134
    %v430 = vunpack.c.h.b16 %v134
    %v431 = vunpack.c.l.b16 %v135
    %v432 = vunpack.c.h.b16 %v135
    %v433 = vunpack.c.l.b16 %v136
    %v434 = vunpack.c.h.b16 %v136
    %v435 = vunpack.c.l.b16 %v137
    %v436 = vunpack.c.h.b16 %v137
    %v437 = vunpack.c.l.b16 %v138
    %v438 = vunpack.c.h.b16 %v138
    %v439 = vunpack.c.l.b16 %v139
    %v440 = vunpack.c.h.b16 %v139
    %v441 = vunpack.c.l.b16 %v140
    %v442 = vunpack.c.h.b16 %v140
    %v443 = vunpack.c.l.b16 %v141
    %v444 = vunpack.c.h.b16 %v141
    %v445 = vunpack.c.l.b16 %v142
    %v446 = vunpack.c.h.b16 %v142
    %v447 = vunpack.c.l.b16 %v143
    %v448 = vunpack.c.h.b16 %v143
    %v449 = vunpack.c.l.b16 %v144
    %v450 = vunpack.c.h.b16 %v144
    %v451 = vunpack.c.l.b16 %v145
    %v452 = vunpack.c.h.b16 %v145
    %v453 = vunpack.c.l.b16 %v146
    %v454 = vunpack.c.h.b16 %v146
    %v455 = vunpack.c.l.b16 %v147
    %v456 = vunpack.c.h.b16 %v147
    %v457 = vunpack.c.l.b16 %v148
    %v458 = vunpack.c.h.b16 %v148
    %v459 = vunpack.c.l.b16 %v149
    %v460 = vunpack.c.h.b16 %v149
    %v461 = vunpack.c.l.b16 %v150
    %v462 = vunpack.c.h.b16 %v150
    %v463 = vunpack.c.l.b16 %v151
    %v464 = vunpack.c.h.b16 %v151
    %v465 = vunpack.c.l.b16 %v152
    %v466 = vunpack.c.h.b16 %v152
    %v467 = vunpack.c.l.b16 %v153
    %v468 = vunpack.c.h.b16 %v153
    %v469 = vunpack.c.l.b16 %v154
    %v470 = vunpack.c.h.b16 %v154
    %v471 = vunpack.c.l.b16 %v155
    %v472 = vunpack.c.h.b16 %v155
    %v473 = vunpack.c.l.b16 %v156
    %v474 = vunpack.c.h.b16 %v156
    %v475 = vunpack.c.l.b16 %v157
    %v476 = vunpack.c.h.b16 %v157
    %v477 = vunpack.c.l.b16 %v158
    %v478 = vunpack.c.h.b16 %v158
    %v479 = vunpack.c.l.b16 %v159
    %v480 = vunpack.c.h.b16 %v159
    %v481 = vunpack.c.l.b16 %v160
    %v482 = vunpack.c.h.b16 %v160
    %v483 = vunpack.c.l.b16 %v161
    %v484 = vunpack.c.h.b16 %v161
    %v485 = vunpack.c.l.b16 %v162
    %v486 = vunpack.c.h.b16 %v162
    %v487 = vunpack.c.l.b16 %v163
    %v488 = vunpack.c.h.b16 %v163
    %v489 = vunpack.c.l.b16 %v164
    %v490 = vunpack.c.h.b16 %v164
    %v491 = vunpack.c.l.b16 %v165
    %v492 = vunpack.c.h.b16 %v165
    %v493 = vunpack.c.l.b16 %v166
    %v494 = vunpack.c.h.b16 %v166
    %v495 = vunpack.c.l.b16 %v167
    %v496 = vunpack.c.h.b16 %v167
    %v497 = vunpack.c.l.b16 %v168
    %v498 = vunpack.c.h.b16 %v168
    %v499 = vunpack.c.l.b16 %v169
    %v500 = vunpack.c.h.b16 %v169
    %v501 = vunpack.c.l.b16 %v170
    %v502 = vunpack.c.h.b16 %v170
    %v503 = vunpack.c.l.b16 %v171
    %v504 = vunpack.c.h.b16 %v171
    %v505 = vunpack.c.l.b16 %v172
    %v506 = vunpack.c.h.b16 %v172
    %v507 = vunpack.c.l.b16 %v173
    %v508 = vunpack.c.h.b16 %v173
    %v509 = vunpack.c.l.b16 %v174
    %v510 = vunpack.c.h.b16 %v174
    %v511 = vunpack.c.l.b16 %v175
    %v512 = vunpack.c.h.b16 %v175
    %v513 = vunpack.c.l.b16 %v176
    %v514 = vunpack.c.h.b16 %v176
    %v515 = vunpack.c.l.b16 %v177
    %v516 = vunpack.c.h.b16 %v177
    %v517 = vunpack.c.l.b16 %v178
    %v518 = vunpack.c.h.b16 %v178
    %v519 = vunpack.c.l.b16 %v179
    %v520 = vunpack.c.h.b16 %v179
    %v521 = vunpack.c.l.b16 %v180
    %v522 = vunpack.c.h.b16 %v180
    %v523 = vunpack.c.l.b16 %v181
    %v524 = vunpack.c.h.b16 %v181
    %v525 = vunpack.c.l.b16 %v182
    %v526 = vunpack.c.h.b16 %v182
    %v527 = vunpack.c.l.b16 %v183
    %v528 = vunpack.c.h.b16 %v183
    %v529 = vunpack.c.l.b16 %v184
    %v530 = vunpack.c.h.b16 %v184
    %v531 = vunpack.c.l.b16 %v185
    %v532 = vunpack.c.h.b16 %v185
    %v533 = vunpack.c.l.b16 %v186
    %v534 = vunpack.c.h.b16 %v186
    %v535 = vunpack.c.l.b16 %v187
    %v536 = vunpack.c.h.b16 %v187
    %v537 = vunpack.c.l.b16 %v188
    %v538 = vunpack.c.h.b16 %v188
    %v539 = vunpack.c.l.b16 %v189
    %v540 = vunpack.c.h.b16 %v189
    %v541 = vunpack.c.l.b16 %v190
    %v542 = vunpack.c.h.b16 %v190
    %v543 = vunpack.c.l.b16 %v191
    %v544 = vunpack.c.h.b16 %v191
    %v545 = vunpack.c.l.b16 %v192
    %v546 = vunpack.c.h.b16 %v192
    %v547 = vunpack.c.l.b16 %v193
    %v548 = vunpack.c.h.b16 %v193
    %v549 = vunpack.c.l.b16 %v194
    %v550 = vunpack.c.h.b16 %v194
    %v551 = vunpack.c.l.b16 %v195
    %v552 = vunpack.c.h.b16 %v195
    %v553 = vunpack.c.l.b16 %v196
    %v554 = vunpack.c.h.b16 %v196
    %v555 = vunpack.c.l.b16 %v197
    %v556 = vunpack.c.h.b16 %v197
    %v557 = vunpack.c.l.b16 %v198
    %v558 = vunpack.c.h.b16 %v198
    %v559 = vunpack.c.l.b16 %v199
    %v560 = vunpack.c.h.b16 %v199
    %v561 = vunpack.c.l.b16 %v200
    %v562 = vunpack.c.h.b16 %v200
    %v563 = vunpack.c.l.b16 %v201
    %v564 = vunpack.c.h.b16 %v201
    %v565 = vunpack.c.l.b16 %v202
    %v566 = vunpack.c.h.b16 %v202
    %v567 = vunpack.c.l.b16 %v203
    %v568 = vunpack.c.h.b16 %v203
    %v569 = vunpack.c.l.b16 %v204
    %v570 = vunpack.c.h.b16 %v204
    %v571 = vunpack.c.l.b16 %v205
    %v572 = vunpack.c.h.b16 %v205
    %v573 = vunpack.c.l.b16 %v206
    %v574 = vunpack.c.h.b16 %v206
    %v575 = vunpack.c.l.b16 %v207
    %v576 = vunpack.c.h.b16 %v207
    %v577 = vunpack.c.l.b16 %v208
    %v578 = vunpack.c.h.b16 %v208
    %v579 = vunpack.c.l.b16 %v209
    %v580 = vunpack.c.h.b16 %v209
    %v581 = vunpack.c.l.b16 %v210
    %v582 = vunpack.c.h.b16 %v210
    %v583 = vunpack.c.l.b16 %v211
    %v584 = vunpack.c.h.b16 %v211
    %v585 = vunpack.c.l.b16 %v212
    %v586 = vunpack.c.h.b16 %v212
    %v587 = vunpack.c.l.b16 %v213
    %v588 = vunpack.c.h.b16 %v213
    %v589 = vunpack.c.l.b16 %v214
    %v590 = vunpack.c.h.b16 %v214
    %v591 = vunpack.c.l.b16 %v215
    %v592 = vunpack.c.h.b16 %v215
    %v593 = vunpack.c.l.b16 %v216
    %v594 = vunpack.c.h.b16 %v216
    %v595 = vunpack.c.l.b16 %v217
    %v596 = vunpack.c.h.b16 %v217
    %v597 = vunpack.c.l.b16 %v218
    %v598 = vunpack.c.h.b16 %v218
    %v599 = vunpack.c.l.b16 %v219
    %v600 = vunpack.c.h.b16 %v219
    %v601 = vunpack.c.l.b16 %v220
    %v602 = vunpack.c.h.b16 %v220
    %v603 = vunpack.c.l.b16 %v221
    %v604 = vunpack.c.h.b16 %v221
    %v605 = vunpack.c.l.b16 %v222
    %v606 = vunpack.c.h.b16 %v222
    %v607 = vunpack.c.l.b16 %v223
    %v608 = vunpack.c.h.b16 %v223
    %v609 = vunpack.c.l.b16 %v224
    %v610 = vunpack.c.h.b16 %v224
    %v611 = vunpack.c.l.b16 %v225
    %v612 = vunpack.c.h.b16 %v225
    %v613 = vunpack.c.l.b16 %v226
    %v614 = vunpack.c.h.b16 %v226
    %v615 = vunpack.c.l.b16 %v227
    %v616 = vunpack.c.h.b16 %v227
    %v617 = vunpack.c.l.b16 %v228
    %v618 = vunpack.c.h.b16 %v228
    %v619 = vunpack.c.l.b16 %v229
    %v620 = vunpack.c.h.b16 %v229
    %v621 = vunpack.c.l.b16 %v230
    %v622 = vunpack.c.h.b16 %v230
    %v623 = vunpack.c.l.b16 %v231
    %v624 = vunpack.c.h.b16 %v231
    %v625 = vunpack.c.l.b16 %v232
    %v626 = vunpack.c.h.b16 %v232
    %v627 = vunpack.c.l.b16 %v233
    %v628 = vunpack.c.h.b16 %v233
    %v629 = vunpack.c.l.b16 %v234
    %v630 = vunpack.c.h.b16 %v234
    %v631 = vpack.c.b16 %v377, %v375
    %v632 = vpack.c.b16 %v378, %v376
    %v633 = vpack.c.b16 %v381, %v379
    %v634 = vpack.c.b16 %v382, %v380
    %v635 = vpack.c.b16 %v385, %v383
    %v636 = vpack.c.b16 %v386, %v384
    %v637 = vpack.c.b16 %v389, %v387
    %v638 = vpack.c.b16 %v390, %v388
    %v639 = vpack.c.b16 %v393, %v391
    %v640 = vpack.c.b16 %v394, %v392
    %v641 = vpack.c.b16 %v397, %v395
    %v642 = vpack.c.b16 %v398, %v396
    %v643 = vpack.c.b16 %v401, %v399
    %v644 = vpack.c.b16 %v402, %v400
    %v645 = vpack.c.b16 %v405, %v403
    %v646 = vpack.c.b16 %v406, %v404
    %v647 = vpack.c.b16 %v409, %v407
    %v648 = vpack.c.b16 %v410, %v408
    %v649 = vpack.c.b16 %v413, %v411
    %v650 = vpack.c.b16 %v414, %v412
    %v651 = vpack.c.b16 %v417, %v415
    %v652 = vpack.c.b16 %v418, %v416
    %v653 = vpack.c.b16 %v421, %v419
    %v654 = vpack.c.b16 %v422, %v420
    %v655 = vpack.c.b16 %v425, %v423
    %v656 = vpack.c.b16 %v426, %v424
    %v657 = vpack.c.b16 %v429, %v427
    %v658 = vpack.c.b16 %v430, %v428
    %v659 = vpack.c.b16 %v433, %v431
    %v660 = vpack.c.b16 %v434, %v432
    %v661 = vpack.c.b16 %v437, %v435
    %v662 = vpack.c.b16 %v438, %v436
    %v663 = vpack.c.b16 %v441, %v439
    %v664 = vpack.c.b16 %v442, %v440
    %v665 = vpack.c.b16 %v445, %v443
    %v666 = vpack.c.b16 %v446, %v444
    %v667 = vpack.c.b16 %v449, %v447
    %v668 = vpack.c.b16 %v450, %v448
    %v669 = vpack.c.b16 %v453, %v451
    %v670 = vpack.c.b16 %v454, %v452
    %v671 = vpack.c.b16 %v457, %v455
    %v672 = vpack.c.b16 %v458, %v456
    %v673 = vpack.c.b16 %v461, %v459
    %v674 = vpack.c.b16 %v462, %v460
    %v675 = vpack.c.b16 %v465, %v463
    %v676 = vpack.c.b16 %v466, %v464
    %v677 = vpack.c.b16 %v469, %v467
    %v678 = vpack.c.b16 %v470, %v468
    %v679 = vpack.c.b16 %v473, %v471
    %v680 = vpack.c.b16 %v474, %v472
    %v681 = vpack.c.b16 %v477, %v475
    %v682 = vpack.c.b16 %v478, %v476
    %v683 = vpack.c.b16 %v481, %v479
    %v684 = vpack.c.b16 %v482, %v480
    %v685 = vpack.c.b16 %v485, %v483
    %v686 = vpack.c.b16 %v486, %v484
    %v687 = vpack.c.b16 %v489, %v487
    %v688 = vpack.c.b16 %v490, %v488
    %v689 = vpack.c.b16 %v493, %v491
    %v690 = vpack.c.b16 %v494, %v492
    %v691 = vpack.c.b16 %v497, %v495
    %v692 = vpack.c.b16 %v498, %v496
    %v693 = vpack.c.b16 %v501, %v499
    %v694 = vpack.c.b16 %v502, %v500
    %v695 = vpack.c.b16 %v505, %v503
    %v696 = vpack.c.b16 %v506, %v504
    %v697 = vpack.c.b16 %v509, %v507
    %v698 = vpack.c.b16 %v510, %v508
    %v699 = vpack.c.b16 %v513, %v511
    %v700 = vpack.c.b16 %v514, %v512
    %v701 = vpack.c.b16 %v517, %v515
    %v702 = vpack.c.b16 %v518, %v516
    %v703 = vpack.c.b16 %v521, %v519
    %v704 = vpack.c.b16 %v522, %v520
    %v705 = vpack.c.b16 %v525, %v523
    %v706 = vpack.c.b16 %v526, %v524
    %v707 = vpack.c.b16 %v529, %v527
    %v708 = vpack.c.b16 %v530, %v528
    %v709 = vpack.c.b16 %v533, %v531
    %v710 = vpack.c.b16 %v534, %v532
    %v711 = vpack.c.b16 %v537, %v535
    %v712 = vpack.c.b16 %v538, %v536
    %v713 = vpack.c.b16 %v541, %v539
    %v714 = vpack.c.b16 %v542, %v540
    %v715 = vpack.c.b16 %v545, %v543
    %v716 = vpack.c.b16 %v546, %v544
    %v717 = vpack.c.b16 %v549, %v547
    %v718 = vpack.c.b16 %v550, %v548
    %v719 = vpack.c.b16 %v553, %v551
    %v720 = vpack.c.b16 %v554, %v552
    %v721 = vpack.c.b16 %v557, %v555
    %v722 = vpack.c.b16 %v558, %v556
    %v723 = vpack.c.b16 %v561, %v559
    %v724 = vpack.c.b16 %v562, %v560
    %v725 = vpack.c.b16 %v565, %v563
    %v726 = vpack.c.b16 %v566, %v564
    %v727 = vpack.c.b16 %v569, %v567
    %v728 = vpack.c.b16 %v570, %v568
    %v729 = vpack.c.b16 %v573, %v571
    %v730 = vpack.c.b16 %v574, %v572
    %v731 = vpack.c.b16 %v577, %v575
    %v732 = vpack.c.b16 %v578, %v576
    %v733 = vpack.c.b16 %v581, %v579
    %v734 = vpack.c.b16 %v582, %v580
    %v735 = vpack.c.b16 %v585, %v583
    %v736 = vpack.c.b16 %v586, %v584
    %v737 = vpack.c.b16 %v589, %v587
    %v738 = vpack.c.b16 %v590, %v588
    %v739 = vpack.c.b16 %v593, %v591
    %v740 = vpack.c.b16 %v594, %v592
    %v741 = vpack.c.b16 %v597, %v595
    %v742 = vpack.c.b16 %v598, %v596
    %v743 = vpack.c.b16 %v601, %v599
    %v744 = vpack.c.b16 %v602, %v600
    %v745 = vpack.c.b16 %v605, %v603
    %v746 = vpack.c.b16 %v606, %v604
    %v747 = vpack.c.b16 %v609, %v607
    %v748 = vpack.c.b16 %v610, %v608
    %v749 = vpack.c.b16 %v613, %v611
    %v750 = vpack.c.b16 %v614, %v612
    %v751 = vpack.c.b16 %v617, %v615
    %v752 = vpack.c.b16 %v618, %v616
    %v753 = vpack.c.b16 %v621, %v619
    %v754 = vpack.c.b16 %v622, %v620
    %v755 = vpack.c.b16 %v625, %v623
    %v756 = vpack.c.b16 %v626, %v624
    %v757 = vpack.c.b16 %v629, %v627
    %v758 = vpack.c.b16 %v630, %v628
    %887 = vmatprep.subr.bf16.mxu0 %v632
    %888 = vmatpush1.bf16.msra.mxu0 %v631
    %889 = vmatprep.subr.bf16.mxu0 %v634
    %890 = vmatpush1.bf16.msra.mxu0 %v633
    %891 = vmatprep.subr.bf16.mxu0 %v636
    %892 = vmatpush1.bf16.msra.mxu0 %v635
    %893 = vmatprep.subr.bf16.mxu0 %v638
    %894 = vmatpush1.bf16.msra.mxu0 %v637
    %895 = vmatprep.subr.bf16.mxu0 %v640
    %896 = vmatpush1.bf16.msra.mxu0 %v639
    %897 = vmatprep.subr.bf16.mxu0 %v642
    %898 = vmatpush1.bf16.msra.mxu0 %v641
    %899 = vmatprep.subr.bf16.mxu0 %v644
    %900 = vmatpush1.bf16.msra.mxu0 %v643
    %901 = vmatprep.subr.bf16.mxu0 %v646
    %902 = vmatpush1.bf16.msra.mxu0 %v645
    %903 = vmatprep.subr.bf16.mxu0 %v648
    %904 = vmatpush1.bf16.msra.mxu0 %v647
    %905 = vmatprep.subr.bf16.mxu0 %v650
    %906 = vmatpush1.bf16.msra.mxu0 %v649
    %907 = vmatprep.subr.bf16.mxu0 %v652
    %908 = vmatpush1.bf16.msra.mxu0 %v651
    %909 = vmatprep.subr.bf16.mxu0 %v654
    %910 = vmatpush1.bf16.msra.mxu0 %v653
    %911 = vmatprep.subr.bf16.mxu0 %v656
    %912 = vmatpush1.bf16.msra.mxu0 %v655
    %913 = vmatprep.subr.bf16.mxu0 %v658
    %914 = vmatpush1.bf16.msra.mxu0 %v657
    %915 = vmatprep.subr.bf16.mxu0 %v660
    %916 = vmatpush1.bf16.msra.mxu0 %v659
    %917 = vmatprep.subr.bf16.mxu0 %v662
    %918 = vmatpush1.bf16.msra.mxu0 %v661
    %919 = vmatprep.mubr.bf16.mxu0 %v100
    %920 = vmatmul.mubr.bf16.gmra.mrb[0].mxu0 %v99
    %v921 = vpop.f32.mrb[0].mxu0
    %v922 = vadd.f32 %v240, %v921
    %v923 = vpop.f32.mrb[0].mxu0
    %v924 = vadd.f32 %v244, %v923
    %v925 = vpop.f32.mrb[0].mxu0
    %v926 = vadd.f32 %v240, %v925
    %v927 = vpop.f32.mrb[0].mxu0
    %v928 = vadd.f32 %v244, %v927
    %929 = vdwg.mxu0
    %930 = vmatprep.subr.bf16.mxu0 %v664
    %931 = vmatpush1.bf16.msra.mxu0 %v663
    %932 = vmatprep.subr.bf16.mxu0 %v666
    %933 = vmatpush1.bf16.msra.mxu0 %v665
    %934 = vmatprep.subr.bf16.mxu0 %v668
    %935 = vmatpush1.bf16.msra.mxu0 %v667
    %936 = vmatprep.subr.bf16.mxu0 %v670
    %937 = vmatpush1.bf16.msra.mxu0 %v669
    %938 = vmatprep.subr.bf16.mxu0 %v672
    %939 = vmatpush1.bf16.msra.mxu0 %v671
    %940 = vmatprep.subr.bf16.mxu0 %v674
    %941 = vmatpush1.bf16.msra.mxu0 %v673
    %942 = vmatprep.subr.bf16.mxu0 %v676
    %943 = vmatpush1.bf16.msra.mxu0 %v675
    %944 = vmatprep.subr.bf16.mxu0 %v678
    %945 = vmatpush1.bf16.msra.mxu0 %v677
    %946 = vmatprep.subr.bf16.mxu0 %v680
    %947 = vmatpush1.bf16.msra.mxu0 %v679
    %948 = vmatprep.subr.bf16.mxu0 %v682
    %949 = vmatpush1.bf16.msra.mxu0 %v681
    %950 = vmatprep.subr.bf16.mxu0 %v684
    %951 = vmatpush1.bf16.msra.mxu0 %v683
    %952 = vmatprep.subr.bf16.mxu0 %v686
    %953 = vmatpush1.bf16.msra.mxu0 %v685
    %954 = vmatprep.subr.bf16.mxu0 %v688
    %955 = vmatpush1.bf16.msra.mxu0 %v687
    %956 = vmatprep.subr.bf16.mxu0 %v690
    %957 = vmatpush1.bf16.msra.mxu0 %v689
    %958 = vmatprep.subr.bf16.mxu0 %v692
    %959 = vmatpush1.bf16.msra.mxu0 %v691
    %960 = vmatprep.subr.bf16.mxu0 %v694
    %961 = vmatpush1.bf16.msra.mxu0 %v693
    %962 = vmatprep.mubr.bf16.mxu0 %v102
    %963 = vmatmul.mubr.bf16.gmra.mrb[0].mxu0 %v101
    %v964 = vpop.f32.mrb[0].mxu0
    %v965 = vadd.f32 %v922, %v964
    %v966 = vpop.f32.mrb[0].mxu0
    %v967 = vadd.f32 %v924, %v966
    %v968 = vpop.f32.mrb[0].mxu0
    %v969 = vadd.f32 %v926, %v968
    %v970 = vpop.f32.mrb[0].mxu0
    %v971 = vadd.f32 %v928, %v970
    %972 = vdwg.mxu0
    %973 = vmatprep.subr.bf16.mxu0 %v696
    %974 = vmatpush1.bf16.msra.mxu0 %v695
    %975 = vmatprep.subr.bf16.mxu0 %v698
    %976 = vmatpush1.bf16.msra.mxu0 %v697
    %977 = vmatprep.subr.bf16.mxu0 %v700
    %978 = vmatpush1.bf16.msra.mxu0 %v699
    %979 = vmatprep.subr.bf16.mxu0 %v702
    %980 = vmatpush1.bf16.msra.mxu0 %v701
    %981 = vmatprep.subr.bf16.mxu0 %v704
    %982 = vmatpush1.bf16.msra.mxu0 %v703
    %983 = vmatprep.subr.bf16.mxu0 %v706
    %984 = vmatpush1.bf16.msra.mxu0 %v705
    %985 = vmatprep.subr.bf16.mxu0 %v708
    %986 = vmatpush1.bf16.msra.mxu0 %v707
    %987 = vmatprep.subr.bf16.mxu0 %v710
    %988 = vmatpush1.bf16.msra.mxu0 %v709
    %989 = vmatprep.subr.bf16.mxu0 %v712
    %990 = vmatpush1.bf16.msra.mxu0 %v711
    %991 = vmatprep.subr.bf16.mxu0 %v714
    %992 = vmatpush1.bf16.msra.mxu0 %v713
    %993 = vmatprep.subr.bf16.mxu0 %v716
    %994 = vmatpush1.bf16.msra.mxu0 %v715
    %995 = vmatprep.subr.bf16.mxu0 %v718
    %996 = vmatpush1.bf16.msra.mxu0 %v717
    %997 = vmatprep.subr.bf16.mxu0 %v720
    %998 = vmatpush1.bf16.msra.mxu0 %v719
    %999 = vmatprep.subr.bf16.mxu0 %v722
    %1000 = vmatpush1.bf16.msra.mxu0 %v721
    %1001 = vmatprep.subr.bf16.mxu0 %v724
    %1002 = vmatpush1.bf16.msra.mxu0 %v723
    %1003 = vmatprep.subr.bf16.mxu0 %v726
    %1004 = vmatpush1.bf16.msra.mxu0 %v725
    %1005 = vmatprep.mubr.bf16.mxu0 %v104
    %1006 = vmatmul.mubr.bf16.gmra.mrb[0].mxu0 %v103
    %v1007 = vpop.f32.mrb[0].mxu0
    %v1008 = vadd.f32 %v965, %v1007
    %v1009 = vpop.f32.mrb[0].mxu0
    %v1010 = vadd.f32 %v967, %v1009
    %v1011 = vpop.f32.mrb[0].mxu0
    %v1012 = vadd.f32 %v969, %v1011
    %v1013 = vpop.f32.mrb[0].mxu0
    %v1014 = vadd.f32 %v971, %v1013
    %1015 = vdwg.mxu0
    %1016 = vmatprep.subr.bf16.mxu0 %v728
    %1017 = vmatpush1.bf16.msra.mxu0 %v727
    %1018 = vmatprep.subr.bf16.mxu0 %v730
    %1019 = vmatpush1.bf16.msra.mxu0 %v729
    %1020 = vmatprep.subr.bf16.mxu0 %v732
    %1021 = vmatpush1.bf16.msra.mxu0 %v731
    %1022 = vmatprep.subr.bf16.mxu0 %v734
    %1023 = vmatpush1.bf16.msra.mxu0 %v733
    %1024 = vmatprep.subr.bf16.mxu0 %v736
    %1025 = vmatpush1.bf16.msra.mxu0 %v735
    %1026 = vmatprep.subr.bf16.mxu0 %v738
    %1027 = vmatpush1.bf16.msra.mxu0 %v737
    %1028 = vmatprep.subr.bf16.mxu0 %v740
    %1029 = vmatpush1.bf16.msra.mxu0 %v739
    %1030 = vmatprep.subr.bf16.mxu0 %v742
    %1031 = vmatpush1.bf16.msra.mxu0 %v741
    %1032 = vmatprep.subr.bf16.mxu0 %v744
    %1033 = vmatpush1.bf16.msra.mxu0 %v743
    %1034 = vmatprep.subr.bf16.mxu0 %v746
    %1035 = vmatpush1.bf16.msra.mxu0 %v745
    %1036 = vmatprep.subr.bf16.mxu0 %v748
    %1037 = vmatpush1.bf16.msra.mxu0 %v747
    %1038 = vmatprep.subr.bf16.mxu0 %v750
    %1039 = vmatpush1.bf16.msra.mxu0 %v749
    %1040 = vmatprep.subr.bf16.mxu0 %v752
    %1041 = vmatpush1.bf16.msra.mxu0 %v751
    %1042 = vmatprep.subr.bf16.mxu0 %v754
    %1043 = vmatpush1.bf16.msra.mxu0 %v753
    %1044 = vmatprep.subr.bf16.mxu0 %v756
    %1045 = vmatpush1.bf16.msra.mxu0 %v755
    %1046 = vmatprep.subr.bf16.mxu0 %v758
    %1047 = vmatpush1.bf16.msra.mxu0 %v757
    %1048 = vmatprep.mubr.bf16.mxu0 %v106
    %1049 = vmatmul.mubr.bf16.gmra.mrb[0].mxu0 %v105
    %v1050 = vpop.f32.mrb[0].mxu0
    %v1051 = vadd.f32 %v1008, %v1050
    %v1052 = vpop.f32.mrb[0].mxu0
    %v1053 = vadd.f32 %v1010, %v1052
    %v1054 = vpop.f32.mrb[0].mxu0
    %v1055 = vadd.f32 %v1012, %v1054
    %v1056 = vpop.f32.mrb[0].mxu0
    %v1057 = vadd.f32 %v1014, %v1056
    %1058 = vdwg.mxu0
    %v1059 = vmax.f32 %v1051, 0.0
    %v1060 = vmax.f32 %v1053, 0.0
    %v1061 = vmax.f32 %v1055, 0.0
    %v1062 = vmax.f32 %v1057, 0.0
    %v1063 = vpack.c.bf16 %v1061, %v1059
    %v1064 = vpack.c.bf16 %v1062, %v1060
    %v1065 = vld [vmem:[#allocation7] sm:$0xf]
    %v1066 = vld [vmem:[#allocation7 + $0x4] sm:$0xf]
    %v1067 = vld [vmem:[#allocation7 + $0x8] sm:$0xf]
    %v1068 = vld [vmem:[#allocation7 + $0xc] sm:$0xf]
    %v1069 = vld [vmem:[#allocation7 + $0x10] sm:$0xf]
    %v1070 = vld [vmem:[#allocation7 + $0x14] sm:$0xf]
    %v1071 = vld [vmem:[#allocation7 + $0x18] sm:$0xf]
    %v1072 = vld [vmem:[#allocation7 + $0x1c] sm:$0xf]
    %v1073 = vld [vmem:[#allocation7 + $0x20] sm:$0xf]
    %v1074 = vld [vmem:[#allocation7 + $0x24] sm:$0xf]
    %v1075 = vld [vmem:[#allocation7 + $0x28] sm:$0xf]
    %v1076 = vld [vmem:[#allocation7 + $0x2c] sm:$0xf]
    %v1077 = vld [vmem:[#allocation7 + $0x30] sm:$0xf]
    %v1078 = vld [vmem:[#allocation7 + $0x34] sm:$0xf]
    %v1079 = vld [vmem:[#allocation7 + $0x38] sm:$0xf]
    %v1080 = vld [vmem:[#allocation7 + $0x3c] sm:$0xf]
    %v1081 = vld [vmem:[#allocation7 + $0x40] sm:$0xf]
    %v1082 = vld [vmem:[#allocation7 + $0x44] sm:$0xf]
    %v1083 = vld [vmem:[#allocation7 + $0x48] sm:$0xf]
    %v1084 = vld [vmem:[#allocation7 + $0x4c] sm:$0xf]
    %v1085 = vld [vmem:[#allocation7 + $0x50] sm:$0xf]
    %v1086 = vld [vmem:[#allocation7 + $0x54] sm:$0xf]
    %v1087 = vld [vmem:[#allocation7 + $0x58] sm:$0xf]
    %v1088 = vld [vmem:[#allocation7 + $0x5c] sm:$0xf]
    %v1089 = vld [vmem:[#allocation7 + $0x60] sm:$0xf]
    %v1090 = vld [vmem:[#allocation7 + $0x64] sm:$0xf]
    %v1091 = vld [vmem:[#allocation7 + $0x68] sm:$0xf]
    %v1092 = vld [vmem:[#allocation7 + $0x6c] sm:$0xf]
    %v1093 = vld [vmem:[#allocation7 + $0x70] sm:$0xf]
    %v1094 = vld [vmem:[#allocation7 + $0x74] sm:$0xf]
    %v1095 = vld [vmem:[#allocation7 + $0x78] sm:$0xf]
    %v1096 = vld [vmem:[#allocation7 + $0x7c] sm:$0xf]
    %v1097 = vld [vmem:[%s4] sm:$0x1]
    %v1099 = vlaneseq
    %v1100 = vshrl.u32 %v1099, 7
    %v1101 = vsub.s32 0, %v1100
    %v1102 = vrot.slane %v1097, %v1101
    %v1136 = vunpack.c.l.b16 %v1065
    %v1137 = vunpack.c.l.b16 %v1066
    %v1138 = vunpack.c.l.b16 %v1067
    %v1139 = vunpack.c.l.b16 %v1068
    %v1140 = vunpack.c.l.b16 %v1069
    %v1141 = vunpack.c.l.b16 %v1070
    %v1142 = vunpack.c.l.b16 %v1071
    %v1143 = vunpack.c.l.b16 %v1072
    %v1144 = vunpack.c.l.b16 %v1073
    %v1145 = vunpack.c.l.b16 %v1074
    %v1146 = vunpack.c.l.b16 %v1075
    %v1147 = vunpack.c.l.b16 %v1076
    %v1148 = vunpack.c.l.b16 %v1077
    %v1149 = vunpack.c.l.b16 %v1078
    %v1150 = vunpack.c.l.b16 %v1079
    %v1151 = vunpack.c.l.b16 %v1080
    %v1152 = vunpack.c.l.b16 %v1081
    %v1153 = vunpack.c.l.b16 %v1082
    %v1154 = vunpack.c.l.b16 %v1083
    %v1155 = vunpack.c.l.b16 %v1084
    %v1156 = vunpack.c.l.b16 %v1085
    %v1157 = vunpack.c.l.b16 %v1086
    %v1158 = vunpack.c.l.b16 %v1087
    %v1159 = vunpack.c.l.b16 %v1088
    %v1160 = vunpack.c.l.b16 %v1089
    %v1161 = vunpack.c.l.b16 %v1090
    %v1162 = vunpack.c.l.b16 %v1091
    %v1163 = vunpack.c.l.b16 %v1092
    %v1164 = vunpack.c.l.b16 %v1093
    %v1165 = vunpack.c.l.b16 %v1094
    %v1166 = vunpack.c.l.b16 %v1095
    %v1167 = vunpack.c.l.b16 %v1096
    %v1168 = vpack.c.b16 %v1137, %v1136
    %v1169 = vpack.c.b16 %v1139, %v1138
    %v1170 = vpack.c.b16 %v1141, %v1140
    %v1171 = vpack.c.b16 %v1143, %v1142
    %v1172 = vpack.c.b16 %v1145, %v1144
    %v1173 = vpack.c.b16 %v1147, %v1146
    %v1174 = vpack.c.b16 %v1149, %v1148
    %v1175 = vpack.c.b16 %v1151, %v1150
    %v1176 = vpack.c.b16 %v1153, %v1152
    %v1177 = vpack.c.b16 %v1155, %v1154
    %v1178 = vpack.c.b16 %v1157, %v1156
    %v1179 = vpack.c.b16 %v1159, %v1158
    %v1180 = vpack.c.b16 %v1161, %v1160
    %v1181 = vpack.c.b16 %v1163, %v1162
    %v1182 = vpack.c.b16 %v1165, %v1164
    %v1183 = vpack.c.b16 %v1167, %v1166
    %1200 = vmatprep.subr.bf16.mxu0 0
    %1201 = vmatpush1.bf16.msra.mxu0 %v1168
    %1202 = vmatprep.subr.bf16.mxu0 0
    %1203 = vmatpush1.bf16.msra.mxu0 %v1169
    %1204 = vmatprep.subr.bf16.mxu0 0
    %1205 = vmatpush1.bf16.msra.mxu0 %v1170
    %1206 = vmatprep.subr.bf16.mxu0 0
    %1207 = vmatpush1.bf16.msra.mxu0 %v1171
    %1208 = vmatprep.subr.bf16.mxu0 0
    %1209 = vmatpush1.bf16.msra.mxu0 %v1172
    %1210 = vmatprep.subr.bf16.mxu0 0
    %1211 = vmatpush1.bf16.msra.mxu0 %v1173
    %1212 = vmatprep.subr.bf16.mxu0 0
    %1213 = vmatpush1.bf16.msra.mxu0 %v1174
    %1214 = vmatprep.subr.bf16.mxu0 0
    %1215 = vmatpush1.bf16.msra.mxu0 %v1175
    %1216 = vmatprep.subr.bf16.mxu0 0
    %1217 = vmatpush1.bf16.msra.mxu0 %v1176
    %1218 = vmatprep.subr.bf16.mxu0 0
    %1219 = vmatpush1.bf16.msra.mxu0 %v1177
    %1220 = vmatprep.subr.bf16.mxu0 0
    %1221 = vmatpush1.bf16.msra.mxu0 %v1178
    %1222 = vmatprep.subr.bf16.mxu0 0
    %1223 = vmatpush1.bf16.msra.mxu0 %v1179
    %1224 = vmatprep.subr.bf16.mxu0 0
    %1225 = vmatpush1.bf16.msra.mxu0 %v1180
    %1226 = vmatprep.subr.bf16.mxu0 0
    %1227 = vmatpush1.bf16.msra.mxu0 %v1181
    %1228 = vmatprep.subr.bf16.mxu0 0
    %1229 = vmatpush1.bf16.msra.mxu0 %v1182
    %1230 = vmatprep.subr.bf16.mxu0 0
    %1231 = vmatpush1.bf16.msra.mxu0 %v1183
    %1232 = vmatprep.mubr.bf16.mxu0 %v1064
    %1233 = vmatmul.mubr.bf16.gmra.mrb[0].mxu0 %v1063
    %v1234 = vpop.f32.mrb[0].mxu0
    %v1235 = vadd.f32 %v1102, %v1234
    %v1236 = vpop.f32.mrb[0].mxu0
    %v1237 = vpop.f32.mrb[0].mxu0
    %v1238 = vadd.f32 %v1102, %v1237
    %v1239 = vpop.f32.mrb[0].mxu0
    %1240 = vdwg.mxu0
    %v1241 = vmax.f32 %v1235, 0.0
    %v1242 = vmax.f32 %v1238, 0.0
    %v1243 = vpack.c.bf16 %v1242, %v1241
    %v1244 = vld [vmem:[#allocation8] sm:$0xf]
    %v1245 = vld [vmem:[#allocation8 + $0x4] sm:$0xf]
    %v1246 = vld [vmem:[#allocation8 + $0x8] sm:$0xf]
    %v1247 = vld [vmem:[#allocation8 + $0xc] sm:$0xf]
    %v1248 = vld [vmem:[#allocation8 + $0x10] sm:$0xf]
    %v1249 = vld [vmem:[#allocation8 + $0x14] sm:$0xf]
    %v1250 = vld [vmem:[#allocation8 + $0x18] sm:$0xf]
    %v1251 = vld [vmem:[#allocation8 + $0x1c] sm:$0xf]
    %v1252 = vld [vmem:[#allocation8 + $0x20] sm:$0xf]
    %v1253 = vld [vmem:[#allocation8 + $0x24] sm:$0xf]
    %v1254 = vld [vmem:[#allocation8 + $0x28] sm:$0xf]
    %v1255 = vld [vmem:[#allocation8 + $0x2c] sm:$0xf]
    %v1256 = vld [vmem:[#allocation8 + $0x30] sm:$0xf]
    %v1257 = vld [vmem:[#allocation8 + $0x34] sm:$0xf]
    %v1258 = vld [vmem:[#allocation8 + $0x38] sm:$0xf]
    %v1259 = vld [vmem:[#allocation8 + $0x3c] sm:$0xf]
    %v1260 = vld [vmem:[%s6] sm:$0x1]
    %v1262 = vlaneseq
    %v1263 = vshrl.u32 %v1262, 7
    %v1264 = vsub.s32 0, %v1263
    %v1265 = vrot.slane %v1260, %v1264
    %v1283 = vunpack.c.l.b16 %v1244
    %v1284 = vunpack.c.l.b16 %v1245
    %v1285 = vunpack.c.l.b16 %v1246
    %v1286 = vunpack.c.l.b16 %v1247
    %v1287 = vunpack.c.l.b16 %v1248
    %v1288 = vunpack.c.l.b16 %v1249
    %v1289 = vunpack.c.l.b16 %v1250
    %v1290 = vunpack.c.l.b16 %v1251
    %v1291 = vunpack.c.l.b16 %v1252
    %v1292 = vunpack.c.l.b16 %v1253
    %v1293 = vunpack.c.l.b16 %v1254
    %v1294 = vunpack.c.l.b16 %v1255
    %v1295 = vunpack.c.l.b16 %v1256
    %v1296 = vunpack.c.l.b16 %v1257
    %v1297 = vunpack.c.l.b16 %v1258
    %v1298 = vunpack.c.l.b16 %v1259
    %v1299 = vpack.c.b16 %v1284, %v1283
    %v1300 = vpack.c.b16 %v1286, %v1285
    %v1301 = vpack.c.b16 %v1288, %v1287
    %v1302 = vpack.c.b16 %v1290, %v1289
    %v1303 = vpack.c.b16 %v1292, %v1291
    %v1304 = vpack.c.b16 %v1294, %v1293
    %v1305 = vpack.c.b16 %v1296, %v1295
    %v1306 = vpack.c.b16 %v1298, %v1297
    %1315 = vmatprep.subr.bf16.mxu0 0
    %1316 = vmatpush1.bf16.msra.mxu0 %v1299
    %1317 = vmatprep.subr.bf16.mxu0 0
    %1318 = vmatpush1.bf16.msra.mxu0 %v1300
    %1319 = vmatprep.subr.bf16.mxu0 0
    %1320 = vmatpush1.bf16.msra.mxu0 %v1301
    %1321 = vmatprep.subr.bf16.mxu0 0
    %1322 = vmatpush1.bf16.msra.mxu0 %v1302
    %1323 = vmatprep.subr.bf16.mxu0 0
    %1324 = vmatpush1.bf16.msra.mxu0 %v1303
    %1325 = vmatprep.subr.bf16.mxu0 0
    %1326 = vmatpush1.bf16.msra.mxu0 %v1304
    %1327 = vmatprep.subr.bf16.mxu0 0
    %1328 = vmatpush1.bf16.msra.mxu0 %v1305
    %1329 = vmatprep.subr.bf16.mxu0 0
    %1330 = vmatpush1.bf16.msra.mxu0 %v1306
    %1331 = vmatprep.subr.bf16.mxu0 0
    %1332 = vmatpush1.bf16.msra.mxu0 0
    %1333 = vmatprep.subr.bf16.mxu0 0
    %1334 = vmatpush1.bf16.msra.mxu0 0
    %1335 = vmatprep.subr.bf16.mxu0 0
    %1336 = vmatpush1.bf16.msra.mxu0 0
    %1337 = vmatprep.subr.bf16.mxu0 0
    %1338 = vmatpush1.bf16.msra.mxu0 0
    %1339 = vmatprep.subr.bf16.mxu0 0
    %1340 = vmatpush1.bf16.msra.mxu0 0
    %1341 = vmatprep.subr.bf16.mxu0 0
    %1342 = vmatpush1.bf16.msra.mxu0 0
    %1343 = vmatprep.subr.bf16.mxu0 0
    %1344 = vmatpush1.bf16.msra.mxu0 0
    %1345 = vmatprep.subr.bf16.mxu0 0
    %1346 = vmatpush1.bf16.msra.mxu0 0
    %1347 = vmatprep.mubr.bf16.mxu0 0
    %1348 = vmatmul.mubr.bf16.gmra.mrb[0].mxu0 %v1243
    %v1349 = vpop.f32.mrb[0].mxu0
    %v1350 = vadd.f32 %v1265, %v1349
    %v1351 = vpop.f32.mrb[0].mxu0
    %v1352 = vpop.f32.mrb[0].mxu0
    %v1353 = vadd.f32 %v1265, %v1352
    %v1354 = vpop.f32.mrb[0].mxu0
    %1355 = vdwg.mxu0
    %1356 = vmax.xlane.f32.xlu0 %v1350
    %v1357 = vpop.xlane.xlu0 %1356
    %1358 = vmax.xlane.f32.xlu0 %v1353
    %v1359 = vpop.xlane.xlu0 %1358
    %v1360 = vsub.f32 %v1350, %v1357
    %v1361 = vsub.f32 %v1353, %v1359
    %v1362 = vmul.f32 %v1360, 1.442695
    %v1363 = vpow.pop %v1362
    %v1364 = vmul.f32 %v1361, 1.442695
    %v1365 = vpow.pop %v1364
    %1366 = vadd.xlane.f32.xlu0 %v1363
    %v1367 = vpop.xlane.xlu0 %1366
    %1368 = vadd.xlane.f32.xlu0 %v1365
    %v1369 = vpop.xlane.xlu0 %1368
    %v1370 = vrcp.pop %v1367
    %v1371 = vrcp.pop %v1369
    %v1372 = vmul.f32 %v1363, %v1370
    %v1373 = vmul.f32 %v1365, %v1371
    %v1374 = vpack.c.bf16 %v1373, %v1372
    %v1376 = vunpack.c.l.b16 %v1374
    %v1377 = vunpack.c.h.b16 %v1374
    %v1378 = vpack.c.b16 %v1376, %v1376
    %v1379 = vpack.c.b16 %v1377, %v1377
    %1382 = vst [vmem:[#allocation10] sm:$0xf] %v1378
    %1383 = vst [vmem:[#allocation10 + $0x4] sm:$0xf] %v1379
    // Predicated region
    $region46: #{tpu_custom_call.1} parent=1 // pred_check
      _
    $region47: #{tpu_custom_call.1} parent=1 // pred_check_branch
      %1385 = sbr.rel (0) target = $region49
    $region48: #{tpu_custom_call.1} parent=1 // pred_region
      %s1387 = ssub.s32 128, 128
      %1388 = vsyncadd [#allocation4], %s1387
      %s1389 = sshll.u32 [#allocation10], 4
      %s1390 = int_to_ptr.vmem [resolvable:$true] %s1389
      %1395 = dma.vmem_to_hbm [thread:$0]  %s1390, 128, %s7, [#allocation4], 64, 64, 4
    $region49: #{tpu_custom_call.1} parent=1 // pred_fallthru
      _
    // Predicated region
    $region50: #{tpu_custom_call.1} parent=1 // pred_check
      _
    $region51: #{tpu_custom_call.1} parent=1 // pred_check_branch
      %1397 = sbr.rel (0) target = $region53
    $region52: #{tpu_custom_call.1} parent=1 // pred_region
      %1398 = dma.done [#allocation4], 128
    $region53: #{tpu_custom_call.1} parent=1 // pred_fallthru
      _
    %1399 = vsyncpa [#allocation3], 1
    %1400 = vsyncpa [#allocation6], 1
    %1401 = vsyncpa [#allocation9], 1
    %1402 = vsyncpa [#allocation4], 1

</llo_original>
